<compile_context>
chip_gen: v7x
topology: tpu7x:2x2x1
jax: 0.10.0
libtpu: 0.0.40
codegen_flags: <defaults>
</compile_context>

<pallas_src>
import functools

import jax
import jax.numpy as jnp
from jax import lax
from jax.experimental import pallas as pl
from jax.experimental.pallas import tpu as pltpu

LRELU_SLOPE = 0.2
BN_EPS = 1e-5


# ----------------------------- Pallas kernel ------------------------------

def _singledisc_kernel(p_ref, w1_ref, bn_ref, w2_ref, o_ref, *, n, ho, wo, k):
    """Fused: conv1 (im2col matmul, MXU) + bias -> BN(batch stats) -> LeakyReLU
    -> final 4x4 conv with Cout=1 (VPU tap accumulation + one channel reduction)."""
    ndf = w1_ref.shape[1]
    m = p_ref.shape[0]                      # n * ho * wo rows of the patch matrix

    # --- DownBlock: conv4x4 s2 p1 as matmul (bf16 operands, f32 accumulation) ---
    conv = jnp.dot(p_ref[...], w1_ref[...], preferred_element_type=jnp.float32)  # (m, ndf)
    conv = conv + bn_ref[0:1, :]            # conv bias

    # BatchNorm (training-mode, biased variance), one-pass statistics.
    inv_m = 1.0 / m
    mean = jnp.sum(conv, axis=0, keepdims=True) * inv_m              # (1, ndf)
    ex2 = jnp.sum(conv * conv, axis=0, keepdims=True) * inv_m        # E[x^2]
    var = ex2 - mean * mean
    scale = bn_ref[1:2, :] * lax.rsqrt(var + BN_EPS)                 # gamma / sqrt(var+eps)
    shift = bn_ref[2:3, :] - mean * scale                            # beta - mean*scale
    y = conv * scale + shift
    y = jnp.where(y >= 0, y, LRELU_SLOPE * y)                        # LeakyReLU(0.2)

    # --- final conv2d(ndf, 1, 4, 1, 0, bias=False): VPU/XLU, no MXU ---
    oh, ow = ho - k + 1, wo - k + 1
    y4 = y.reshape(n, ho, wo, ndf)          # layout-preserving (last dim unchanged)
    w2 = w2_ref[...]                        # (k*k, ndf) f32, row = kh*k + kw
    acc = jnp.zeros((n, oh, ow, ndf), jnp.float32)
    for i in range(k):
        for j in range(k):
            tap = y4[:, i:i + oh, j:j + ow, :]                       # static slice
            acc = acc + tap * w2[i * k + j:i * k + j + 1, :]
    o_ref[...] = jnp.sum(acc, axis=-1)      # (n, oh, ow), single cross-lane reduce


# ------------------------------- JAX glue ----------------------------------

def im2col_nhwc(x, kh, kw, stride, pad):
    """(N,H,W,C) -> ((N*Ho*Wo, kh*kw*C), (N,Ho,Wo)); tap order (kh,kw,c), c fastest."""
    if pad:
        x = jnp.pad(x, ((0, 0), (pad, pad), (pad, pad), (0, 0)))
    n, h, w, c = x.shape
    ho = (h - kh) // stride + 1
    wo = (w - kw) // stride + 1
    taps = []
    for i in range(kh):
        for j in range(kw):
            taps.append(x[:, i:i + stride * (ho - 1) + 1:stride,
                          j:j + stride * (wo - 1) + 1:stride, :])
    patches = jnp.concatenate(taps, axis=-1)              # (n, ho, wo, kh*kw*c)
    return patches.reshape(n * ho * wo, kh * kw * c), (n, ho, wo)


def conv_w_to_mat(w):
    """Torch conv weight (Cout, Cin, KH, KW) -> matmul weight (KH*KW*Cin, Cout)."""
    cout, cin, kh, kw = w.shape
    return jnp.transpose(w, (2, 3, 1, 0)).reshape(kh * kw * cin, cout)


def spectral_norm(w, u, eps=1e-12):
    """One power iteration, mirroring torch.nn.utils.spectral_norm at first forward."""
    cout = w.shape[0]
    wm = w.reshape(cout, -1)
    u = u / (jnp.linalg.norm(u) + eps)
    v = wm.T @ u
    v = v / (jnp.linalg.norm(v) + eps)
    u = wm @ v
    u = u / (jnp.linalg.norm(u) + eps)
    sigma = u @ (wm @ v)
    return w / sigma


def init_params(key, nc=4, ndf=32):
    k1, k2, k3, k4, k5, ku1, ku2 = jax.random.split(key, 7)
    w1 = jax.random.normal(k1, (ndf, nc, 4, 4), jnp.float32) / jnp.sqrt(nc * 16.0)
    b1 = 0.1 * jax.random.normal(k2, (ndf,), jnp.float32)
    gamma = 1.0 + 0.1 * jax.random.normal(k3, (ndf,), jnp.float32)
    beta = 0.1 * jax.random.normal(k4, (ndf,), jnp.float32)
    w2 = jax.random.normal(k5, (1, ndf, 4, 4), jnp.float32) / jnp.sqrt(ndf * 16.0)
    # conv2d(...) in the backbone is spectral_norm(nn.Conv2d(...)) — applied
    # deterministically to the weights (parameter preprocessing, JAX glue).
    w1 = spectral_norm(w1, jax.random.normal(ku1, (ndf,), jnp.float32))
    w2 = spectral_norm(w2, jax.random.normal(ku2, (1,), jnp.float32))
    return dict(w1=w1, b1=b1, gamma=gamma, beta=beta, w2=w2)


def single_disc_forward(x_nchw, c, params):
    del c  # SingleDisc.forward ignores the conditioning input
    ndf = params["w1"].shape[0]
    x = jnp.transpose(x_nchw, (0, 2, 3, 1)).astype(jnp.float32)       # NCHW -> NHWC

    k = 4
    # im2col for the stride-2 conv (tiny: 128 x 64); tap order matches conv_w_to_mat.
    p1, (n, ho, wo) = im2col_nhwc(x, k, k, stride=2, pad=1)           # (N*8*8, 4*4*nc)
    w1m = conv_w_to_mat(params["w1"])                                 # (64, ndf)
    bn = jnp.stack([params["b1"], params["gamma"], params["beta"]], 0)  # (3, ndf) f32
    # Final conv weight as per-tap rows: w2m[i*k+j, c] = w2[0, c, i, j]  (f32 for VPU path)
    w2m = jnp.transpose(params["w2"][0], (1, 2, 0)).reshape(k * k, ndf)

    oh, ow = ho - k + 1, wo - k + 1
    kernel = functools.partial(_singledisc_kernel, n=n, ho=ho, wo=wo, k=k)
    out = pl.pallas_call(
        kernel,
        out_shape=jax.ShapeDtypeStruct((n, oh, ow), jnp.float32),
        in_specs=[pl.BlockSpec(memory_space=pltpu.MemorySpace.VMEM)] * 4,
        out_specs=pl.BlockSpec(memory_space=pltpu.MemorySpace.VMEM),
    )(p1.astype(jnp.bfloat16), w1m.astype(jnp.bfloat16), bn, w2m)
    return out[:, None, :, :]                                         # back to NCHW (N,1,5,5)


# ---------------------- pure-JAX reference (for checking) -------------------

def ref_forward(x_nchw, c, params):
    del c
    dn = ("NCHW", "OIHW", "NCHW")
    y = lax.conv_general_dilated(x_nchw, params["w1"], (2, 2), ((1, 1), (1, 1)),
                                 dimension_numbers=dn)
    y = y + params["b1"][None, :, None, None]
    mean = jnp.mean(y, axis=(0, 2, 3), keepdims=True)
    var = jnp.mean((y - mean) ** 2, axis=(0, 2, 3), keepdims=True)
    y = (y - mean) / jnp.sqrt(var + BN_EPS)
    y = y * params["gamma"][None, :, None, None] + params["beta"][None, :, None, None]
    y = jnp.where(y >= 0, y, LRELU_SLOPE * y)
    return lax.conv_general_dilated(y, params["w2"], (1, 1), ((0, 0), (0, 0)),
                                    dimension_numbers=dn)


if __name__ == "__main__":
    key = jax.random.PRNGKey(0)
    kx, kc, kp = jax.random.split(key, 3)
    x = jax.random.normal(kx, (2, 4, 16, 16), jnp.float32)   # NCHW, like PyTorch
    c = jax.random.normal(kc, (2, 8), jnp.float32)           # unused conditioning
    params = init_params(kp, nc=4, ndf=32)

    out = jax.jit(single_disc_forward)(x, c, params)
    out = jax.block_until_ready(out)

    ref = ref_forward(x, c, params)
    assert out.shape == (2, 1, 5, 5), out.shape
    # bf16 MXU operands (f32 accumulation) vs f32 reference -> slightly looser tolerance.
    assert jnp.allclose(out, ref, rtol=5e-2, atol=5e-2), float(jnp.max(jnp.abs(out - ref)))
    print("KERNEL_OK")
</pallas_src>

<mosaic_0001>
module attributes {stable_mosaic.version = 11 : i64} {
  func.func @_singledisc_kernel(%arg0: memref<128x64xbf16, #tpu.memory_space<vmem>>, %arg1: memref<64x32xbf16, #tpu.memory_space<vmem>>, %arg2: memref<3x32xf32, #tpu.memory_space<vmem>>, %arg3: memref<16x32xf32, #tpu.memory_space<vmem>>, %arg4: memref<2x5x5xf32, #tpu.memory_space<vmem>>) attributes {dimension_semantics = [], scalar_prefetch = 0 : i64, scratch_operands = 0 : i64, tpu.core_type = #tpu.core_type<tc>} {
    %c0 = arith.constant 0 : index
    %c0_0 = arith.constant 0 : index
    %0 = vector.load %arg0[%c0, %c0_0] : memref<128x64xbf16, #tpu.memory_space<vmem>>, vector<128x64xbf16>
    %c0_1 = arith.constant 0 : index
    %c0_2 = arith.constant 0 : index
    %1 = vector.load %arg1[%c0_1, %c0_2] : memref<64x32xbf16, #tpu.memory_space<vmem>>, vector<64x32xbf16>
    %cst = arith.constant dense<0.000000e+00> : vector<128x32xf32>
    %2 = tpu.matmul %0, %1, %cst {dimension_numbers = #tpu.dot_dimension_numbers<[1], [0], [0], [1], [0, 0, 1, 1], [], []>} : vector<128x64xbf16>, vector<64x32xbf16>, vector<128x32xf32> -> vector<128x32xf32>
    %c0_3 = arith.constant 0 : index
    %c0_4 = arith.constant 0 : index
    %3 = vector.load %arg2[%c0_3, %c0_4] : memref<3x32xf32, #tpu.memory_space<vmem>>, vector<1x32xf32>
    %4 = vector.broadcast %3 : vector<1x32xf32> to vector<128x32xf32>
    %5 = arith.addf %2, %4 : vector<128x32xf32>
    %cst_5 = arith.constant dense<0.000000e+00> : vector<32xf32>
    %6 = vector.multi_reduction <add>, %5, %cst_5 [0] : vector<128x32xf32> to vector<32xf32>
    %7 = vector.shape_cast %6 : vector<32xf32> to vector<1x32xf32>
    %cst_6 = arith.constant 7.812500e-03 : f32
    %8 = vector.broadcast %cst_6 : f32 to vector<1x32xf32>
    %9 = arith.mulf %7, %8 : vector<1x32xf32>
    %10 = arith.mulf %5, %5 : vector<128x32xf32>
    %cst_7 = arith.constant dense<0.000000e+00> : vector<32xf32>
    %11 = vector.multi_reduction <add>, %10, %cst_7 [0] : vector<128x32xf32> to vector<32xf32>
    %12 = vector.shape_cast %11 : vector<32xf32> to vector<1x32xf32>
    %cst_8 = arith.constant 7.812500e-03 : f32
    %13 = vector.broadcast %cst_8 : f32 to vector<1x32xf32>
    %14 = arith.mulf %12, %13 : vector<1x32xf32>
    %15 = arith.mulf %9, %9 : vector<1x32xf32>
    %16 = arith.subf %14, %15 : vector<1x32xf32>
    %c1 = arith.constant 1 : index
    %c0_9 = arith.constant 0 : index
    %17 = vector.load %arg2[%c1, %c0_9] : memref<3x32xf32, #tpu.memory_space<vmem>>, vector<1x32xf32>
    %cst_10 = arith.constant 9.99999974E-6 : f32
    %18 = vector.broadcast %cst_10 : f32 to vector<1x32xf32>
    %19 = arith.addf %16, %18 : vector<1x32xf32>
    %20 = math.rsqrt %19 : vector<1x32xf32>
    %21 = arith.mulf %17, %20 : vector<1x32xf32>
    %c2 = arith.constant 2 : index
    %c0_11 = arith.constant 0 : index
    %22 = vector.load %arg2[%c2, %c0_11] : memref<3x32xf32, #tpu.memory_space<vmem>>, vector<1x32xf32>
    %23 = arith.mulf %9, %21 : vector<1x32xf32>
    %24 = arith.subf %22, %23 : vector<1x32xf32>
    %25 = vector.broadcast %21 : vector<1x32xf32> to vector<128x32xf32>
    %26 = arith.mulf %5, %25 : vector<128x32xf32>
    %27 = vector.broadcast %24 : vector<1x32xf32> to vector<128x32xf32>
    %28 = arith.addf %26, %27 : vector<128x32xf32>
    %cst_12 = arith.constant 0.000000e+00 : f32
    %29 = vector.broadcast %cst_12 : f32 to vector<128x32xf32>
    %30 = arith.cmpf oge, %28, %29 : vector<128x32xf32>
    %cst_13 = arith.constant 2.000000e-01 : f32
    %31 = vector.broadcast %cst_13 : f32 to vector<128x32xf32>
    %32 = arith.mulf %31, %28 : vector<128x32xf32>
    %33 = arith.select %30, %28, %32 : vector<128x32xi1>, vector<128x32xf32>
    %34 = vector.shape_cast %33 : vector<128x32xf32> to vector<2x8x8x32xf32>
    %c0_14 = arith.constant 0 : index
    %c0_15 = arith.constant 0 : index
    %35 = vector.load %arg3[%c0_14, %c0_15] : memref<16x32xf32, #tpu.memory_space<vmem>>, vector<16x32xf32>
    %cst_16 = arith.constant 0.000000e+00 : f32
    %36 = vector.broadcast %cst_16 : f32 to vector<2x5x5x32xf32>
    %37 = vector.extract_strided_slice %34 {offsets = [0, 0, 0, 0], sizes = [2, 5, 5, 32], strides = [1, 1, 1, 1]} : vector<2x8x8x32xf32> to vector<2x5x5x32xf32>
    %38 = vector.extract_strided_slice %35 {offsets = [0, 0], sizes = [1, 32], strides = [1, 1]} : vector<16x32xf32> to vector<1x32xf32>
    %39 = vector.shape_cast %38 : vector<1x32xf32> to vector<1x1x1x32xf32>
    %40 = vector.broadcast %39 : vector<1x1x1x32xf32> to vector<2x5x5x32xf32>
    %41 = arith.mulf %37, %40 : vector<2x5x5x32xf32>
    %42 = arith.addf %36, %41 : vector<2x5x5x32xf32>
    %43 = vector.extract_strided_slice %34 {offsets = [0, 0, 1, 0], sizes = [2, 5, 5, 32], strides = [1, 1, 1, 1]} : vector<2x8x8x32xf32> to vector<2x5x5x32xf32>
    %44 = vector.extract_strided_slice %35 {offsets = [1, 0], sizes = [1, 32], strides = [1, 1]} : vector<16x32xf32> to vector<1x32xf32>
    %45 = vector.shape_cast %44 : vector<1x32xf32> to vector<1x1x1x32xf32>
    %46 = vector.broadcast %45 : vector<1x1x1x32xf32> to vector<2x5x5x32xf32>
    %47 = arith.mulf %43, %46 : vector<2x5x5x32xf32>
    %48 = arith.addf %42, %47 : vector<2x5x5x32xf32>
    %49 = vector.extract_strided_slice %34 {offsets = [0, 0, 2, 0], sizes = [2, 5, 5, 32], strides = [1, 1, 1, 1]} : vector<2x8x8x32xf32> to vector<2x5x5x32xf32>
    %50 = vector.extract_strided_slice %35 {offsets = [2, 0], sizes = [1, 32], strides = [1, 1]} : vector<16x32xf32> to vector<1x32xf32>
    %51 = vector.shape_cast %50 : vector<1x32xf32> to vector<1x1x1x32xf32>
    %52 = vector.broadcast %51 : vector<1x1x1x32xf32> to vector<2x5x5x32xf32>
    %53 = arith.mulf %49, %52 : vector<2x5x5x32xf32>
    %54 = arith.addf %48, %53 : vector<2x5x5x32xf32>
    %55 = vector.extract_strided_slice %34 {offsets = [0, 0, 3, 0], sizes = [2, 5, 5, 32], strides = [1, 1, 1, 1]} : vector<2x8x8x32xf32> to vector<2x5x5x32xf32>
    %56 = vector.extract_strided_slice %35 {offsets = [3, 0], sizes = [1, 32], strides = [1, 1]} : vector<16x32xf32> to vector<1x32xf32>
    %57 = vector.shape_cast %56 : vector<1x32xf32> to vector<1x1x1x32xf32>
    %58 = vector.broadcast %57 : vector<1x1x1x32xf32> to vector<2x5x5x32xf32>
    %59 = arith.mulf %55, %58 : vector<2x5x5x32xf32>
    %60 = arith.addf %54, %59 : vector<2x5x5x32xf32>
    %61 = vector.extract_strided_slice %34 {offsets = [0, 1, 0, 0], sizes = [2, 5, 5, 32], strides = [1, 1, 1, 1]} : vector<2x8x8x32xf32> to vector<2x5x5x32xf32>
    %62 = vector.extract_strided_slice %35 {offsets = [4, 0], sizes = [1, 32], strides = [1, 1]} : vector<16x32xf32> to vector<1x32xf32>
    %63 = vector.shape_cast %62 : vector<1x32xf32> to vector<1x1x1x32xf32>
    %64 = vector.broadcast %63 : vector<1x1x1x32xf32> to vector<2x5x5x32xf32>
    %65 = arith.mulf %61, %64 : vector<2x5x5x32xf32>
    %66 = arith.addf %60, %65 : vector<2x5x5x32xf32>
    %67 = vector.extract_strided_slice %34 {offsets = [0, 1, 1, 0], sizes = [2, 5, 5, 32], strides = [1, 1, 1, 1]} : vector<2x8x8x32xf32> to vector<2x5x5x32xf32>
    %68 = vector.extract_strided_slice %35 {offsets = [5, 0], sizes = [1, 32], strides = [1, 1]} : vector<16x32xf32> to vector<1x32xf32>
    %69 = vector.shape_cast %68 : vector<1x32xf32> to vector<1x1x1x32xf32>
    %70 = vector.broadcast %69 : vector<1x1x1x32xf32> to vector<2x5x5x32xf32>
    %71 = arith.mulf %67, %70 : vector<2x5x5x32xf32>
    %72 = arith.addf %66, %71 : vector<2x5x5x32xf32>
    %73 = vector.extract_strided_slice %34 {offsets = [0, 1, 2, 0], sizes = [2, 5, 5, 32], strides = [1, 1, 1, 1]} : vector<2x8x8x32xf32> to vector<2x5x5x32xf32>
    %74 = vector.extract_strided_slice %35 {offsets = [6, 0], sizes = [1, 32], strides = [1, 1]} : vector<16x32xf32> to vector<1x32xf32>
    %75 = vector.shape_cast %74 : vector<1x32xf32> to vector<1x1x1x32xf32>
    %76 = vector.broadcast %75 : vector<1x1x1x32xf32> to vector<2x5x5x32xf32>
    %77 = arith.mulf %73, %76 : vector<2x5x5x32xf32>
    %78 = arith.addf %72, %77 : vector<2x5x5x32xf32>
    %79 = vector.extract_strided_slice %34 {offsets = [0, 1, 3, 0], sizes = [2, 5, 5, 32], strides = [1, 1, 1, 1]} : vector<2x8x8x32xf32> to vector<2x5x5x32xf32>
    %80 = vector.extract_strided_slice %35 {offsets = [7, 0], sizes = [1, 32], strides = [1, 1]} : vector<16x32xf32> to vector<1x32xf32>
    %81 = vector.shape_cast %80 : vector<1x32xf32> to vector<1x1x1x32xf32>
    %82 = vector.broadcast %81 : vector<1x1x1x32xf32> to vector<2x5x5x32xf32>
    %83 = arith.mulf %79, %82 : vector<2x5x5x32xf32>
    %84 = arith.addf %78, %83 : vector<2x5x5x32xf32>
    %85 = vector.extract_strided_slice %34 {offsets = [0, 2, 0, 0], sizes = [2, 5, 5, 32], strides = [1, 1, 1, 1]} : vector<2x8x8x32xf32> to vector<2x5x5x32xf32>
    %86 = vector.extract_strided_slice %35 {offsets = [8, 0], sizes = [1, 32], strides = [1, 1]} : vector<16x32xf32> to vector<1x32xf32>
    %87 = vector.shape_cast %86 : vector<1x32xf32> to vector<1x1x1x32xf32>
    %88 = vector.broadcast %87 : vector<1x1x1x32xf32> to vector<2x5x5x32xf32>
    %89 = arith.mulf %85, %88 : vector<2x5x5x32xf32>
    %90 = arith.addf %84, %89 : vector<2x5x5x32xf32>
    %91 = vector.extract_strided_slice %34 {offsets = [0, 2, 1, 0], sizes = [2, 5, 5, 32], strides = [1, 1, 1, 1]} : vector<2x8x8x32xf32> to vector<2x5x5x32xf32>
    %92 = vector.extract_strided_slice %35 {offsets = [9, 0], sizes = [1, 32], strides = [1, 1]} : vector<16x32xf32> to vector<1x32xf32>
    %93 = vector.shape_cast %92 : vector<1x32xf32> to vector<1x1x1x32xf32>
    %94 = vector.broadcast %93 : vector<1x1x1x32xf32> to vector<2x5x5x32xf32>
    %95 = arith.mulf %91, %94 : vector<2x5x5x32xf32>
    %96 = arith.addf %90, %95 : vector<2x5x5x32xf32>
    %97 = vector.extract_strided_slice %34 {offsets = [0, 2, 2, 0], sizes = [2, 5, 5, 32], strides = [1, 1, 1, 1]} : vector<2x8x8x32xf32> to vector<2x5x5x32xf32>
    %98 = vector.extract_strided_slice %35 {offsets = [10, 0], sizes = [1, 32], strides = [1, 1]} : vector<16x32xf32> to vector<1x32xf32>
    %99 = vector.shape_cast %98 : vector<1x32xf32> to vector<1x1x1x32xf32>
    %100 = vector.broadcast %99 : vector<1x1x1x32xf32> to vector<2x5x5x32xf32>
    %101 = arith.mulf %97, %100 : vector<2x5x5x32xf32>
    %102 = arith.addf %96, %101 : vector<2x5x5x32xf32>
    %103 = vector.extract_strided_slice %34 {offsets = [0, 2, 3, 0], sizes = [2, 5, 5, 32], strides = [1, 1, 1, 1]} : vector<2x8x8x32xf32> to vector<2x5x5x32xf32>
    %104 = vector.extract_strided_slice %35 {offsets = [11, 0], sizes = [1, 32], strides = [1, 1]} : vector<16x32xf32> to vector<1x32xf32>
    %105 = vector.shape_cast %104 : vector<1x32xf32> to vector<1x1x1x32xf32>
    %106 = vector.broadcast %105 : vector<1x1x1x32xf32> to vector<2x5x5x32xf32>
    %107 = arith.mulf %103, %106 : vector<2x5x5x32xf32>
    %108 = arith.addf %102, %107 : vector<2x5x5x32xf32>
    %109 = vector.extract_strided_slice %34 {offsets = [0, 3, 0, 0], sizes = [2, 5, 5, 32], strides = [1, 1, 1, 1]} : vector<2x8x8x32xf32> to vector<2x5x5x32xf32>
    %110 = vector.extract_strided_slice %35 {offsets = [12, 0], sizes = [1, 32], strides = [1, 1]} : vector<16x32xf32> to vector<1x32xf32>
    %111 = vector.shape_cast %110 : vector<1x32xf32> to vector<1x1x1x32xf32>
    %112 = vector.broadcast %111 : vector<1x1x1x32xf32> to vector<2x5x5x32xf32>
    %113 = arith.mulf %109, %112 : vector<2x5x5x32xf32>
    %114 = arith.addf %108, %113 : vector<2x5x5x32xf32>
    %115 = vector.extract_strided_slice %34 {offsets = [0, 3, 1, 0], sizes = [2, 5, 5, 32], strides = [1, 1, 1, 1]} : vector<2x8x8x32xf32> to vector<2x5x5x32xf32>
    %116 = vector.extract_strided_slice %35 {offsets = [13, 0], sizes = [1, 32], strides = [1, 1]} : vector<16x32xf32> to vector<1x32xf32>
    %117 = vector.shape_cast %116 : vector<1x32xf32> to vector<1x1x1x32xf32>
    %118 = vector.broadcast %117 : vector<1x1x1x32xf32> to vector<2x5x5x32xf32>
    %119 = arith.mulf %115, %118 : vector<2x5x5x32xf32>
    %120 = arith.addf %114, %119 : vector<2x5x5x32xf32>
    %121 = vector.extract_strided_slice %34 {offsets = [0, 3, 2, 0], sizes = [2, 5, 5, 32], strides = [1, 1, 1, 1]} : vector<2x8x8x32xf32> to vector<2x5x5x32xf32>
    %122 = vector.extract_strided_slice %35 {offsets = [14, 0], sizes = [1, 32], strides = [1, 1]} : vector<16x32xf32> to vector<1x32xf32>
    %123 = vector.shape_cast %122 : vector<1x32xf32> to vector<1x1x1x32xf32>
    %124 = vector.broadcast %123 : vector<1x1x1x32xf32> to vector<2x5x5x32xf32>
    %125 = arith.mulf %121, %124 : vector<2x5x5x32xf32>
    %126 = arith.addf %120, %125 : vector<2x5x5x32xf32>
    %127 = vector.extract_strided_slice %34 {offsets = [0, 3, 3, 0], sizes = [2, 5, 5, 32], strides = [1, 1, 1, 1]} : vector<2x8x8x32xf32> to vector<2x5x5x32xf32>
    %128 = vector.extract_strided_slice %35 {offsets = [15, 0], sizes = [1, 32], strides = [1, 1]} : vector<16x32xf32> to vector<1x32xf32>
    %129 = vector.shape_cast %128 : vector<1x32xf32> to vector<1x1x1x32xf32>
    %130 = vector.broadcast %129 : vector<1x1x1x32xf32> to vector<2x5x5x32xf32>
    %131 = arith.mulf %127, %130 : vector<2x5x5x32xf32>
    %132 = arith.addf %126, %131 : vector<2x5x5x32xf32>
    %cst_17 = arith.constant dense<0.000000e+00> : vector<2x5x5xf32>
    %133 = vector.multi_reduction <add>, %132, %cst_17 [3] : vector<2x5x5x32xf32> to vector<2x5x5xf32>
    %c0_18 = arith.constant 0 : index
    %c0_19 = arith.constant 0 : index
    %c0_20 = arith.constant 0 : index
    %134 = vector.load %arg4[%c0_18, %c0_19, %c0_20] : memref<2x5x5xf32, #tpu.memory_space<vmem>>, vector<2x5x5xf32>
    tpu.vector_store %arg4[%c0_18, %c0_19, %c0_20], %133 {strides = array<i32>} : memref<2x5x5xf32, #tpu.memory_space<vmem>>, vector<2x5x5xf32>,
    return
  }
}

</mosaic_0001>

<llo_original>
// kernel: single_disc_forward.1
$region0: #{single_disc_forward.1}
  #allocation0 [shape = 'u32[]', space=smem, size = 0x4, offset = 0x4, fixed_abs, tag = 'smem constant byte address 0x4 - core index']
  #allocation1 [shape = 'u32[144,128]{1,0:T(1,128)}', space=vmem, size = 0x12000, scoped, tag = 'internal scratch']
  %s0 = inlined_call_operand.vmem [shape: bf16[128,64], index: 0, kind: input, shape index: {}]
  %s1 = inlined_call_operand.vmem [shape: bf16[64,32], index: 1, kind: input, shape index: {}]
  %s2 = inlined_call_operand.vmem [shape: f32[3,32], index: 2, kind: input, shape index: {}]
  %s3 = inlined_call_operand.vmem [shape: f32[16,32], index: 3, kind: input, shape index: {}]
  %s4 = inlined_call_operand.vmem [shape: f32[2,5,5], index: 4, kind: output, shape index: {}]
  %s5 = sld [smem:[#allocation0]]
  $region26: #{single_disc_forward.1} parent=0
    _
  %s7 = ssub.s32 1, %s5
  %s8 = scalar_select 0, %s7, %s5
  // Predicated region
  $region2: #{single_disc_forward.1} parent=0 // pred_check
    _
  $region3: #{single_disc_forward.1} parent=0 // pred_check_branch
    %10 = sbr.rel (0) target = $region5
  $region4: #{single_disc_forward.1} parent=0 // pred_region
    _
  $region5: #{single_disc_forward.1} parent=0 // pred_fallthru
    _
  // Predicated region
  $region6: #{single_disc_forward.1} parent=0 // pred_check
    _
  $region7: #{single_disc_forward.1} parent=0 // pred_check_branch
    %12 = sbr.rel (0) target = $region9
  $region8: #{single_disc_forward.1} parent=0 // pred_region
    _
  $region9: #{single_disc_forward.1} parent=0 // pred_fallthru
    _
  // Predicated region
  $region10: #{single_disc_forward.1} parent=0 // pred_check
    _
  $region11: #{single_disc_forward.1} parent=0 // pred_check_branch
    %14 = sbr.rel (0) target = $region13
  $region12: #{single_disc_forward.1} parent=0 // pred_region
    _
  $region13: #{single_disc_forward.1} parent=0 // pred_fallthru
    _
  // Predicated region
  $region14: #{single_disc_forward.1} parent=0 // pred_check
    _
  $region15: #{single_disc_forward.1} parent=0 // pred_check_branch
    %16 = sbr.rel (0) target = $region17
  $region16: #{single_disc_forward.1} parent=0 // pred_region
    _
  $region17: #{single_disc_forward.1} parent=0 // pred_fallthru
    _
  %v18 = vld [vmem:[%s0] sm:$0xf]
  %v19 = vld [vmem:[%s0 + $0x4] sm:$0xf]
  %v20 = vld [vmem:[%s0 + $0x8] sm:$0xf]
  %v21 = vld [vmem:[%s0 + $0xc] sm:$0xf]
  %v22 = vld [vmem:[%s0 + $0x10] sm:$0xf]
  %v23 = vld [vmem:[%s0 + $0x14] sm:$0xf]
  %v24 = vld [vmem:[%s0 + $0x18] sm:$0xf]
  %v25 = vld [vmem:[%s0 + $0x1c] sm:$0xf]
  %v26 = vld [vmem:[%s0 + $0x20] sm:$0xf]
  %v27 = vld [vmem:[%s0 + $0x24] sm:$0xf]
  %v28 = vld [vmem:[%s0 + $0x28] sm:$0xf]
  %v29 = vld [vmem:[%s0 + $0x2c] sm:$0xf]
  %v30 = vld [vmem:[%s0 + $0x30] sm:$0xf]
  %v31 = vld [vmem:[%s0 + $0x34] sm:$0xf]
  %v32 = vld [vmem:[%s0 + $0x38] sm:$0xf]
  %v33 = vld [vmem:[%s0 + $0x3c] sm:$0xf]
  %v34 = vld [vmem:[%s1] sm:$0xf]
  %v35 = vld [vmem:[%s1 + $0x4] sm:$0xf]
  %v36 = vld [vmem:[%s1 + $0x8] sm:$0xf]
  %v37 = vld [vmem:[%s1 + $0xc] sm:$0xf]
  %v38 = vld [vmem:[%s1 + $0x10] sm:$0xf]
  %v39 = vld [vmem:[%s1 + $0x14] sm:$0xf]
  %v40 = vld [vmem:[%s1 + $0x18] sm:$0xf]
  %v41 = vld [vmem:[%s1 + $0x1c] sm:$0xf]
  %v42 = vld [vmem:[%s2] sm:$0x1]
  %v43 = vlaneseq
  %v44 = vshrl.u32 %v43, 7
  %v45 = vsub.s32 0, %v44
  %v46 = vrot.slane %v42, %v45
  %v63 = vunpack.c.l.b16 %v18
  %v64 = vunpack.c.l.b16 %v19
  %v65 = vunpack.c.l.b16 %v20
  %v66 = vunpack.c.l.b16 %v21
  %v67 = vunpack.c.l.b16 %v22
  %v68 = vunpack.c.l.b16 %v23
  %v69 = vunpack.c.l.b16 %v24
  %v70 = vunpack.c.l.b16 %v25
  %v71 = vunpack.c.l.b16 %v26
  %v72 = vunpack.c.l.b16 %v27
  %v73 = vunpack.c.l.b16 %v28
  %v74 = vunpack.c.l.b16 %v29
  %v75 = vunpack.c.l.b16 %v30
  %v76 = vunpack.c.l.b16 %v31
  %v77 = vunpack.c.l.b16 %v32
  %v78 = vunpack.c.l.b16 %v33
  %v79 = vpack.c.b16 %v64, %v63
  %v80 = vpack.c.b16 %v66, %v65
  %v81 = vpack.c.b16 %v68, %v67
  %v82 = vpack.c.b16 %v70, %v69
  %v83 = vpack.c.b16 %v72, %v71
  %v84 = vpack.c.b16 %v74, %v73
  %v85 = vpack.c.b16 %v76, %v75
  %v86 = vpack.c.b16 %v78, %v77
  %v95 = vunpack.c.l.b16 %v34
  %v96 = vunpack.c.l.b16 %v35
  %v97 = vunpack.c.l.b16 %v36
  %v98 = vunpack.c.l.b16 %v37
  %v99 = vunpack.c.l.b16 %v38
  %v100 = vunpack.c.l.b16 %v39
  %v101 = vunpack.c.l.b16 %v40
  %v102 = vunpack.c.l.b16 %v41
  %v103 = vpack.c.b16 %v96, %v95
  %v104 = vpack.c.b16 %v98, %v97
  %v105 = vpack.c.b16 %v100, %v99
  %v106 = vpack.c.b16 %v102, %v101
  %vm111 = vcmask 523264
  %v113 = vsel %vm111, %v79, 0
  %v116 = vsel %vm111, %v80, 0
  %v119 = vsel %vm111, %v81, 0
  %v122 = vsel %vm111, %v82, 0
  %v125 = vsel %vm111, %v83, 0
  %v128 = vsel %vm111, %v84, 0
  %v131 = vsel %vm111, %v85, 0
  %v134 = vsel %vm111, %v86, 0
  %136 = vmatprep.subr.bf16.mxu0 0
  %137 = vmatpush1.bf16.msra.mxu0 %v103
  %138 = vmatprep.subr.bf16.mxu0 0
  %139 = vmatpush1.bf16.msra.mxu0 %v104
  %140 = vmatprep.subr.bf16.mxu0 0
  %141 = vmatpush1.bf16.msra.mxu0 %v105
  %142 = vmatprep.subr.bf16.mxu0 0
  %143 = vmatpush1.bf16.msra.mxu0 %v106
  %144 = vmatprep.subr.bf16.mxu0 0
  %145 = vmatpush1.bf16.msra.mxu0 0
  %146 = vmatprep.subr.bf16.mxu0 0
  %147 = vmatpush1.bf16.msra.mxu0 0
  %148 = vmatprep.subr.bf16.mxu0 0
  %149 = vmatpush1.bf16.msra.mxu0 0
  %150 = vmatprep.subr.bf16.mxu0 0
  %151 = vmatpush1.bf16.msra.mxu0 0
  %152 = vmatprep.subr.bf16.mxu0 0
  %153 = vmatpush1.bf16.msra.mxu0 0
  %154 = vmatprep.subr.bf16.mxu0 0
  %155 = vmatpush1.bf16.msra.mxu0 0
  %156 = vmatprep.subr.bf16.mxu0 0
  %157 = vmatpush1.bf16.msra.mxu0 0
  %158 = vmatprep.subr.bf16.mxu0 0
  %159 = vmatpush1.bf16.msra.mxu0 0
  %160 = vmatprep.subr.bf16.mxu0 0
  %161 = vmatpush1.bf16.msra.mxu0 0
  %162 = vmatprep.subr.bf16.mxu0 0
  %163 = vmatpush1.bf16.msra.mxu0 0
  %164 = vmatprep.subr.bf16.mxu0 0
  %165 = vmatpush1.bf16.msra.mxu0 0
  %166 = vmatprep.subr.bf16.mxu0 0
  %167 = vmatpush1.bf16.msra.mxu0 0
  %168 = vmatprep.mubr.bf16.mxu0 0
  %169 = vmatmul.mubr.bf16.gmra.mrb[0].mxu0 %v113
  %v170 = vpop.f32.mrb[0].mxu0
  %v171 = vadd.f32 %v46, %v170
  %v172 = vpop.f32.mrb[0].mxu0
  %v173 = vpop.f32.mrb[0].mxu0
  %v174 = vadd.f32 %v46, %v173
  %v175 = vpop.f32.mrb[0].mxu0
  %176 = vmatprep.mubr.bf16.mxu0 0
  %177 = vmatmul.mubr.bf16.gmra.mrb[0].mxu0 %v116
  %v178 = vpop.f32.mrb[0].mxu0
  %v179 = vadd.f32 %v46, %v178
  %v180 = vpop.f32.mrb[0].mxu0
  %v181 = vpop.f32.mrb[0].mxu0
  %v182 = vadd.f32 %v46, %v181
  %v183 = vpop.f32.mrb[0].mxu0
  %184 = vmatprep.mubr.bf16.mxu0 0
  %185 = vmatmul.mubr.bf16.gmra.mrb[0].mxu0 %v119
  %v186 = vpop.f32.mrb[0].mxu0
  %v187 = vadd.f32 %v46, %v186
  %v188 = vpop.f32.mrb[0].mxu0
  %v189 = vpop.f32.mrb[0].mxu0
  %v190 = vadd.f32 %v46, %v189
  %v191 = vpop.f32.mrb[0].mxu0
  %192 = vmatprep.mubr.bf16.mxu0 0
  %193 = vmatmul.mubr.bf16.gmra.mrb[0].mxu0 %v122
  %v194 = vpop.f32.mrb[0].mxu0
  %v195 = vadd.f32 %v46, %v194
  %v196 = vpop.f32.mrb[0].mxu0
  %v197 = vpop.f32.mrb[0].mxu0
  %v198 = vadd.f32 %v46, %v197
  %v199 = vpop.f32.mrb[0].mxu0
  %200 = vmatprep.mubr.bf16.mxu0 0
  %201 = vmatmul.mubr.bf16.gmra.mrb[0].mxu0 %v125
  %v202 = vpop.f32.mrb[0].mxu0
  %v203 = vadd.f32 %v46, %v202
  %v204 = vpop.f32.mrb[0].mxu0
  %v205 = vpop.f32.mrb[0].mxu0
  %v206 = vadd.f32 %v46, %v205
  %v207 = vpop.f32.mrb[0].mxu0
  %208 = vmatprep.mubr.bf16.mxu0 0
  %209 = vmatmul.mubr.bf16.gmra.mrb[0].mxu0 %v128
  %v210 = vpop.f32.mrb[0].mxu0
  %v211 = vadd.f32 %v46, %v210
  %v212 = vpop.f32.mrb[0].mxu0
  %v213 = vpop.f32.mrb[0].mxu0
  %v214 = vadd.f32 %v46, %v213
  %v215 = vpop.f32.mrb[0].mxu0
  %216 = vmatprep.mubr.bf16.mxu0 0
  %217 = vmatmul.mubr.bf16.gmra.mrb[0].mxu0 %v131
  %v218 = vpop.f32.mrb[0].mxu0
  %v219 = vadd.f32 %v46, %v218
  %v220 = vpop.f32.mrb[0].mxu0
  %v221 = vpop.f32.mrb[0].mxu0
  %v222 = vadd.f32 %v46, %v221
  %v223 = vpop.f32.mrb[0].mxu0
  %224 = vmatprep.mubr.bf16.mxu0 0
  %225 = vmatmul.mubr.bf16.gmra.mrb[0].mxu0 %v134
  %v226 = vpop.f32.mrb[0].mxu0
  %v227 = vadd.f32 %v46, %v226
  %v228 = vpop.f32.mrb[0].mxu0
  %v229 = vpop.f32.mrb[0].mxu0
  %v230 = vadd.f32 %v46, %v229
  %v231 = vpop.f32.mrb[0].mxu0
  %232 = vdwg.mxu0
  %vm233 = vcmask 261120
  %v234 = vsel %vm233, %v171, 0.0
  %v235 = vsel %vm233, %v174, 0.0
  %v236 = vadd.f32 %v234, %v235
  %v237 = vsel %vm233, %v179, 0.0
  %v238 = vadd.f32 %v236, %v237
  %v239 = vsel %vm233, %v182, 0.0
  %v240 = vadd.f32 %v238, %v239
  %v241 = vsel %vm233, %v187, 0.0
  %v242 = vadd.f32 %v240, %v241
  %v243 = vsel %vm233, %v190, 0.0
  %v244 = vadd.f32 %v242, %v243
  %v245 = vsel %vm233, %v195, 0.0
  %v246 = vadd.f32 %v244, %v245
  %v247 = vsel %vm233, %v198, 0.0
  %v248 = vadd.f32 %v246, %v247
  %v249 = vsel %vm233, %v203, 0.0
  %v250 = vadd.f32 %v248, %v249
  %v251 = vsel %vm233, %v206, 0.0
  %v252 = vadd.f32 %v250, %v251
  %v253 = vsel %vm233, %v211, 0.0
  %v254 = vadd.f32 %v252, %v253
  %v255 = vsel %vm233, %v214, 0.0
  %v256 = vadd.f32 %v254, %v255
  %v257 = vsel %vm233, %v219, 0.0
  %v258 = vadd.f32 %v256, %v257
  %v259 = vsel %vm233, %v222, 0.0
  %v260 = vadd.f32 %v258, %v259
  %v261 = vsel %vm233, %v227, 0.0
  %v262 = vadd.f32 %v260, %v261
  %v263 = vsel %vm233, %v230, 0.0
  %v264 = vadd.f32 %v262, %v263
  %v265 = vrot.slane %v264, 4
  %v266 = vadd.f32 %v264, %v265
  %v267 = vrot.slane %v266, 2
  %v268 = vadd.f32 %v266, %v267
  %v269 = vrot.slane %v268, 1
  %v270 = vadd.f32 %v268, %v269
  %v271 = vmul.f32 %v270, 0.0078125
  %v272 = vmul.f32 %v171, %v171
  %v273 = vmul.f32 %v174, %v174
  %v274 = vmul.f32 %v179, %v179
  %v275 = vmul.f32 %v182, %v182
  %v276 = vmul.f32 %v187, %v187
  %v277 = vmul.f32 %v190, %v190
  %v278 = vmul.f32 %v195, %v195
  %v279 = vmul.f32 %v198, %v198
  %v280 = vmul.f32 %v203, %v203
  %v281 = vmul.f32 %v206, %v206
  %v282 = vmul.f32 %v211, %v211
  %v283 = vmul.f32 %v214, %v214
  %v284 = vmul.f32 %v219, %v219
  %v285 = vmul.f32 %v222, %v222
  %v286 = vmul.f32 %v227, %v227
  %v287 = vmul.f32 %v230, %v230
  %v288 = vsel %vm233, %v272, 0.0
  %v289 = vsel %vm233, %v273, 0.0
  %v290 = vadd.f32 %v288, %v289
  %v291 = vsel %vm233, %v274, 0.0
  %v292 = vadd.f32 %v290, %v291
  %v293 = vsel %vm233, %v275, 0.0
  %v294 = vadd.f32 %v292, %v293
  %v295 = vsel %vm233, %v276, 0.0
  %v296 = vadd.f32 %v294, %v295
  %v297 = vsel %vm233, %v277, 0.0
  %v298 = vadd.f32 %v296, %v297
  %v299 = vsel %vm233, %v278, 0.0
  %v300 = vadd.f32 %v298, %v299
  %v301 = vsel %vm233, %v279, 0.0
  %v302 = vadd.f32 %v300, %v301
  %v303 = vsel %vm233, %v280, 0.0
  %v304 = vadd.f32 %v302, %v303
  %v305 = vsel %vm233, %v281, 0.0
  %v306 = vadd.f32 %v304, %v305
  %v307 = vsel %vm233, %v282, 0.0
  %v308 = vadd.f32 %v306, %v307
  %v309 = vsel %vm233, %v283, 0.0
  %v310 = vadd.f32 %v308, %v309
  %v311 = vsel %vm233, %v284, 0.0
  %v312 = vadd.f32 %v310, %v311
  %v313 = vsel %vm233, %v285, 0.0
  %v314 = vadd.f32 %v312, %v313
  %v315 = vsel %vm233, %v286, 0.0
  %v316 = vadd.f32 %v314, %v315
  %v317 = vsel %vm233, %v287, 0.0
  %v318 = vadd.f32 %v316, %v317
  %v319 = vrot.slane %v318, 4
  %v320 = vadd.f32 %v318, %v319
  %v321 = vrot.slane %v320, 2
  %v322 = vadd.f32 %v320, %v321
  %v323 = vrot.slane %v322, 1
  %v324 = vadd.f32 %v322, %v323
  %v325 = vmul.f32 %v324, 0.0078125
  %v326 = vmul.f32 %v271, %v271
  %v327 = vsub.f32 %v325, %v326
  %v328 = vld [vmem:[%s2 + $0x1] sm:$0x1]
  %v329 = vadd.f32 %v327, 1e-05
  %v330 = vrsqrt.pop %v329
  %v331 = vmul.f32 %v328, %v330
  %v332 = vld [vmem:[%s2 + $0x2] sm:$0x1]
  %v333 = vmul.f32 %v271, %v331
  %v334 = vsub.f32 %v332, %v333
  %v335 = vlaneseq
  %v336 = vshrl.u32 %v335, 7
  %v337 = vsub.s32 0, %v336
  %v338 = vrot.slane %v331, %v337
  %v339 = vmul.f32 %v171, %v338
  %v340 = vmul.f32 %v174, %v338
  %v341 = vmul.f32 %v179, %v338
  %v342 = vmul.f32 %v182, %v338
  %v343 = vmul.f32 %v187, %v338
  %v344 = vmul.f32 %v190, %v338
  %v345 = vmul.f32 %v195, %v338
  %v346 = vmul.f32 %v198, %v338
  %v347 = vmul.f32 %v203, %v338
  %v348 = vmul.f32 %v206, %v338
  %v349 = vmul.f32 %v211, %v338
  %v350 = vmul.f32 %v214, %v338
  %v351 = vmul.f32 %v219, %v338
  %v352 = vmul.f32 %v222, %v338
  %v353 = vmul.f32 %v227, %v338
  %v354 = vmul.f32 %v230, %v338
  %v355 = vlaneseq
  %v356 = vshrl.u32 %v355, 7
  %v357 = vsub.s32 0, %v356
  %v358 = vrot.slane %v334, %v357
  %v359 = vadd.f32 %v339, %v358
  %v360 = vadd.f32 %v340, %v358
  %v361 = vadd.f32 %v341, %v358
  %v362 = vadd.f32 %v342, %v358
  %v363 = vadd.f32 %v343, %v358
  %v364 = vadd.f32 %v344, %v358
  %v365 = vadd.f32 %v345, %v358
  %v366 = vadd.f32 %v346, %v358
  %v367 = vadd.f32 %v347, %v358
  %v368 = vadd.f32 %v348, %v358
  %v369 = vadd.f32 %v349, %v358
  %v370 = vadd.f32 %v350, %v358
  %v371 = vadd.f32 %v351, %v358
  %v372 = vadd.f32 %v352, %v358
  %v373 = vadd.f32 %v353, %v358
  %v374 = vadd.f32 %v354, %v358
  %vm375 = vcmp.ge.f32.partialorder %v359, 0.0
  %vm376 = vcmp.ge.f32.partialorder %v360, 0.0
  %vm377 = vcmp.ge.f32.partialorder %v361, 0.0
  %vm378 = vcmp.ge.f32.partialorder %v362, 0.0
  %vm379 = vcmp.ge.f32.partialorder %v363, 0.0
  %vm380 = vcmp.ge.f32.partialorder %v364, 0.0
  %vm381 = vcmp.ge.f32.partialorder %v365, 0.0
  %vm382 = vcmp.ge.f32.partialorder %v366, 0.0
  %vm383 = vcmp.ge.f32.partialorder %v367, 0.0
  %vm384 = vcmp.ge.f32.partialorder %v368, 0.0
  %vm385 = vcmp.ge.f32.partialorder %v369, 0.0
  %vm386 = vcmp.ge.f32.partialorder %v370, 0.0
  %vm387 = vcmp.ge.f32.partialorder %v371, 0.0
  %vm388 = vcmp.ge.f32.partialorder %v372, 0.0
  %vm389 = vcmp.ge.f32.partialorder %v373, 0.0
  %vm390 = vcmp.ge.f32.partialorder %v374, 0.0
  %v391 = vmul.f32 %v359, 0.2
  %v392 = vmul.f32 %v360, 0.2
  %v393 = vmul.f32 %v361, 0.2
  %v394 = vmul.f32 %v362, 0.2
  %v395 = vmul.f32 %v363, 0.2
  %v396 = vmul.f32 %v364, 0.2
  %v397 = vmul.f32 %v365, 0.2
  %v398 = vmul.f32 %v366, 0.2
  %v399 = vmul.f32 %v367, 0.2
  %v400 = vmul.f32 %v368, 0.2
  %v401 = vmul.f32 %v369, 0.2
  %v402 = vmul.f32 %v370, 0.2
  %v403 = vmul.f32 %v371, 0.2
  %v404 = vmul.f32 %v372, 0.2
  %v405 = vmul.f32 %v373, 0.2
  %v406 = vmul.f32 %v374, 0.2
  %v407 = vsel %vm375, %v359, %v391
  %v408 = vsel %vm376, %v360, %v392
  %v409 = vsel %vm377, %v361, %v393
  %v410 = vsel %vm378, %v362, %v394
  %v411 = vsel %vm379, %v363, %v395
  %v412 = vsel %vm380, %v364, %v396
  %v413 = vsel %vm381, %v365, %v397
  %v414 = vsel %vm382, %v366, %v398
  %v415 = vsel %vm383, %v367, %v399
  %v416 = vsel %vm384, %v368, %v400
  %v417 = vsel %vm385, %v369, %v401
  %v418 = vsel %vm386, %v370, %v402
  %v419 = vsel %vm387, %v371, %v403
  %v420 = vsel %vm388, %v372, %v404
  %v421 = vsel %vm389, %v373, %v405
  %v422 = vsel %vm390, %v374, %v406
  %v423 = vld [vmem:[%s3] sm:$0xff]
  %v424 = vld [vmem:[%s3 + $0x8] sm:$0xff]
  %v425 = vlaneseq
  %v426 = vshrl.u32 %v425, 7
  %v427 = vsub.s32 0, %v426
  %v428 = vrot.slane %v423, %v427
  %v429 = vmul.f32 %v407, %v428
  %v430 = vmul.f32 %v408, %v428
  %v431 = vmul.f32 %v409, %v428
  %v432 = vmul.f32 %v410, %v428
  %v433 = vmul.f32 %v411, %v428
  %v434 = vmul.f32 %v415, %v428
  %v435 = vmul.f32 %v416, %v428
  %v436 = vmul.f32 %v417, %v428
  %v437 = vmul.f32 %v418, %v428
  %v438 = vmul.f32 %v419, %v428
  %v439 = vadd.f32 %v429, 0.0
  %v440 = vadd.f32 %v430, 0.0
  %v441 = vadd.f32 %v431, 0.0
  %v442 = vadd.f32 %v432, 0.0
  %v443 = vadd.f32 %v433, 0.0
  %v444 = vadd.f32 %v434, 0.0
  %v445 = vadd.f32 %v435, 0.0
  %v446 = vadd.f32 %v436, 0.0
  %v447 = vadd.f32 %v437, 0.0
  %v448 = vadd.f32 %v438, 0.0
  %v449 = vlaneseq
  %v450 = vshrl.u32 %v449, 7
  %v451 = vsub.s32 1, %v450
  %v452 = vrot.slane %v423, %v451
  %v453 = vmul.f32 %v407, %v452
  %v454 = vmul.f32 %v408, %v452
  %v455 = vmul.f32 %v409, %v452
  %v456 = vmul.f32 %v410, %v452
  %v457 = vmul.f32 %v411, %v452
  %v458 = vmul.f32 %v415, %v452
  %v459 = vmul.f32 %v416, %v452
  %v460 = vmul.f32 %v417, %v452
  %v461 = vmul.f32 %v418, %v452
  %v462 = vmul.f32 %v419, %v452
  %v473 = vrot.slane %v453, 1
  %v474 = vrot.slane %v454, 1
  %v475 = vrot.slane %v455, 1
  %v476 = vrot.slane %v456, 1
  %v477 = vrot.slane %v457, 1
  %v478 = vrot.slane %v458, 1
  %v479 = vrot.slane %v459, 1
  %v480 = vrot.slane %v460, 1
  %v481 = vrot.slane %v461, 1
  %v482 = vrot.slane %v462, 1
  %v493 = vadd.f32 %v439, %v473
  %v494 = vadd.f32 %v440, %v474
  %v495 = vadd.f32 %v441, %v475
  %v496 = vadd.f32 %v442, %v476
  %v497 = vadd.f32 %v443, %v477
  %v498 = vadd.f32 %v444, %v478
  %v499 = vadd.f32 %v445, %v479
  %v500 = vadd.f32 %v446, %v480
  %v501 = vadd.f32 %v447, %v481
  %v502 = vadd.f32 %v448, %v482
  %v503 = vlaneseq
  %v504 = vshrl.u32 %v503, 7
  %v505 = vsub.s32 2, %v504
  %v506 = vrot.slane %v423, %v505
  %v507 = vmul.f32 %v407, %v506
  %v508 = vmul.f32 %v408, %v506
  %v509 = vmul.f32 %v409, %v506
  %v510 = vmul.f32 %v410, %v506
  %v511 = vmul.f32 %v411, %v506
  %v512 = vmul.f32 %v415, %v506
  %v513 = vmul.f32 %v416, %v506
  %v514 = vmul.f32 %v417, %v506
  %v515 = vmul.f32 %v418, %v506
  %v516 = vmul.f32 %v419, %v506
  %v527 = vrot.slane %v507, 2
  %v528 = vrot.slane %v508, 2
  %v529 = vrot.slane %v509, 2
  %v530 = vrot.slane %v510, 2
  %v531 = vrot.slane %v511, 2
  %v532 = vrot.slane %v512, 2
  %v533 = vrot.slane %v513, 2
  %v534 = vrot.slane %v514, 2
  %v535 = vrot.slane %v515, 2
  %v536 = vrot.slane %v516, 2
  %v547 = vadd.f32 %v493, %v527
  %v548 = vadd.f32 %v494, %v528
  %v549 = vadd.f32 %v495, %v529
  %v550 = vadd.f32 %v496, %v530
  %v551 = vadd.f32 %v497, %v531
  %v552 = vadd.f32 %v498, %v532
  %v553 = vadd.f32 %v499, %v533
  %v554 = vadd.f32 %v500, %v534
  %v555 = vadd.f32 %v501, %v535
  %v556 = vadd.f32 %v502, %v536
  %v557 = vlaneseq
  %v558 = vshrl.u32 %v557, 7
  %v559 = vsub.s32 3, %v558
  %v560 = vrot.slane %v423, %v559
  %v561 = vmul.f32 %v407, %v560
  %v562 = vmul.f32 %v408, %v560
  %v563 = vmul.f32 %v409, %v560
  %v564 = vmul.f32 %v410, %v560
  %v565 = vmul.f32 %v411, %v560
  %v566 = vmul.f32 %v415, %v560
  %v567 = vmul.f32 %v416, %v560
  %v568 = vmul.f32 %v417, %v560
  %v569 = vmul.f32 %v418, %v560
  %v570 = vmul.f32 %v419, %v560
  %v581 = vrot.slane %v561, 3
  %v582 = vrot.slane %v562, 3
  %v583 = vrot.slane %v563, 3
  %v584 = vrot.slane %v564, 3
  %v585 = vrot.slane %v565, 3
  %v586 = vrot.slane %v566, 3
  %v587 = vrot.slane %v567, 3
  %v588 = vrot.slane %v568, 3
  %v589 = vrot.slane %v569, 3
  %v590 = vrot.slane %v570, 3
  %v601 = vadd.f32 %v547, %v581
  %v602 = vadd.f32 %v548, %v582
  %v603 = vadd.f32 %v549, %v583
  %v604 = vadd.f32 %v550, %v584
  %v605 = vadd.f32 %v551, %v585
  %v606 = vadd.f32 %v552, %v586
  %v607 = vadd.f32 %v553, %v587
  %v608 = vadd.f32 %v554, %v588
  %v609 = vadd.f32 %v555, %v589
  %v610 = vadd.f32 %v556, %v590
  %v611 = vlaneseq
  %v612 = vshrl.u32 %v611, 7
  %v613 = vsub.s32 4, %v612
  %v614 = vrot.slane %v423, %v613
  %v615 = vmul.f32 %v408, %v614
  %v616 = vmul.f32 %v409, %v614
  %v617 = vmul.f32 %v410, %v614
  %v618 = vmul.f32 %v411, %v614
  %v619 = vmul.f32 %v412, %v614
  %v620 = vmul.f32 %v416, %v614
  %v621 = vmul.f32 %v417, %v614
  %v622 = vmul.f32 %v418, %v614
  %v623 = vmul.f32 %v419, %v614
  %v624 = vmul.f32 %v420, %v614
  %v625 = vadd.f32 %v601, %v615
  %v626 = vadd.f32 %v602, %v616
  %v627 = vadd.f32 %v603, %v617
  %v628 = vadd.f32 %v604, %v618
  %v629 = vadd.f32 %v605, %v619
  %v630 = vadd.f32 %v606, %v620
  %v631 = vadd.f32 %v607, %v621
  %v632 = vadd.f32 %v608, %v622
  %v633 = vadd.f32 %v609, %v623
  %v634 = vadd.f32 %v610, %v624
  %v635 = vlaneseq
  %v636 = vshrl.u32 %v635, 7
  %v637 = vsub.s32 5, %v636
  %v638 = vrot.slane %v423, %v637
  %v639 = vmul.f32 %v408, %v638
  %v640 = vmul.f32 %v409, %v638
  %v641 = vmul.f32 %v410, %v638
  %v642 = vmul.f32 %v411, %v638
  %v643 = vmul.f32 %v412, %v638
  %v644 = vmul.f32 %v416, %v638
  %v645 = vmul.f32 %v417, %v638
  %v646 = vmul.f32 %v418, %v638
  %v647 = vmul.f32 %v419, %v638
  %v648 = vmul.f32 %v420, %v638
  %v659 = vrot.slane %v639, 1
  %v660 = vrot.slane %v640, 1
  %v661 = vrot.slane %v641, 1
  %v662 = vrot.slane %v642, 1
  %v663 = vrot.slane %v643, 1
  %v664 = vrot.slane %v644, 1
  %v665 = vrot.slane %v645, 1
  %v666 = vrot.slane %v646, 1
  %v667 = vrot.slane %v647, 1
  %v668 = vrot.slane %v648, 1
  %v679 = vadd.f32 %v625, %v659
  %v680 = vadd.f32 %v626, %v660
  %v681 = vadd.f32 %v627, %v661
  %v682 = vadd.f32 %v628, %v662
  %v683 = vadd.f32 %v629, %v663
  %v684 = vadd.f32 %v630, %v664
  %v685 = vadd.f32 %v631, %v665
  %v686 = vadd.f32 %v632, %v666
  %v687 = vadd.f32 %v633, %v667
  %v688 = vadd.f32 %v634, %v668
  %v689 = vlaneseq
  %v690 = vshrl.u32 %v689, 7
  %v691 = vsub.s32 6, %v690
  %v692 = vrot.slane %v423, %v691
  %v693 = vmul.f32 %v408, %v692
  %v694 = vmul.f32 %v409, %v692
  %v695 = vmul.f32 %v410, %v692
  %v696 = vmul.f32 %v411, %v692
  %v697 = vmul.f32 %v412, %v692
  %v698 = vmul.f32 %v416, %v692
  %v699 = vmul.f32 %v417, %v692
  %v700 = vmul.f32 %v418, %v692
  %v701 = vmul.f32 %v419, %v692
  %v702 = vmul.f32 %v420, %v692
  %v713 = vrot.slane %v693, 2
  %v714 = vrot.slane %v694, 2
  %v715 = vrot.slane %v695, 2
  %v716 = vrot.slane %v696, 2
  %v717 = vrot.slane %v697, 2
  %v718 = vrot.slane %v698, 2
  %v719 = vrot.slane %v699, 2
  %v720 = vrot.slane %v700, 2
  %v721 = vrot.slane %v701, 2
  %v722 = vrot.slane %v702, 2
  %v733 = vadd.f32 %v679, %v713
  %v734 = vadd.f32 %v680, %v714
  %v735 = vadd.f32 %v681, %v715
  %v736 = vadd.f32 %v682, %v716
  %v737 = vadd.f32 %v683, %v717
  %v738 = vadd.f32 %v684, %v718
  %v739 = vadd.f32 %v685, %v719
  %v740 = vadd.f32 %v686, %v720
  %v741 = vadd.f32 %v687, %v721
  %v742 = vadd.f32 %v688, %v722
  %v743 = vlaneseq
  %v744 = vshrl.u32 %v743, 7
  %v745 = vsub.s32 7, %v744
  %v746 = vrot.slane %v423, %v745
  %v747 = vmul.f32 %v408, %v746
  %v748 = vmul.f32 %v409, %v746
  %v749 = vmul.f32 %v410, %v746
  %v750 = vmul.f32 %v411, %v746
  %v751 = vmul.f32 %v412, %v746
  %v752 = vmul.f32 %v416, %v746
  %v753 = vmul.f32 %v417, %v746
  %v754 = vmul.f32 %v418, %v746
  %v755 = vmul.f32 %v419, %v746
  %v756 = vmul.f32 %v420, %v746
  %v767 = vrot.slane %v747, 3
  %v768 = vrot.slane %v748, 3
  %v769 = vrot.slane %v749, 3
  %v770 = vrot.slane %v750, 3
  %v771 = vrot.slane %v751, 3
  %v772 = vrot.slane %v752, 3
  %v773 = vrot.slane %v753, 3
  %v774 = vrot.slane %v754, 3
  %v775 = vrot.slane %v755, 3
  %v776 = vrot.slane %v756, 3
  %v787 = vadd.f32 %v733, %v767
  %v788 = vadd.f32 %v734, %v768
  %v789 = vadd.f32 %v735, %v769
  %v790 = vadd.f32 %v736, %v770
  %v791 = vadd.f32 %v737, %v771
  %v792 = vadd.f32 %v738, %v772
  %v793 = vadd.f32 %v739, %v773
  %v794 = vadd.f32 %v740, %v774
  %v795 = vadd.f32 %v741, %v775
  %v796 = vadd.f32 %v742, %v776
  %v797 = vlaneseq
  %v798 = vshrl.u32 %v797, 7
  %v799 = vsub.s32 0, %v798
  %v800 = vrot.slane %v424, %v799
  %v801 = vmul.f32 %v409, %v800
  %v802 = vmul.f32 %v410, %v800
  %v803 = vmul.f32 %v411, %v800
  %v804 = vmul.f32 %v412, %v800
  %v805 = vmul.f32 %v413, %v800
  %v806 = vmul.f32 %v417, %v800
  %v807 = vmul.f32 %v418, %v800
  %v808 = vmul.f32 %v419, %v800
  %v809 = vmul.f32 %v420, %v800
  %v810 = vmul.f32 %v421, %v800
  %v811 = vadd.f32 %v787, %v801
  %v812 = vadd.f32 %v788, %v802
  %v813 = vadd.f32 %v789, %v803
  %v814 = vadd.f32 %v790, %v804
  %v815 = vadd.f32 %v791, %v805
  %v816 = vadd.f32 %v792, %v806
  %v817 = vadd.f32 %v793, %v807
  %v818 = vadd.f32 %v794, %v808
  %v819 = vadd.f32 %v795, %v809
  %v820 = vadd.f32 %v796, %v810
  %v821 = vlaneseq
  %v822 = vshrl.u32 %v821, 7
  %v823 = vsub.s32 1, %v822
  %v824 = vrot.slane %v424, %v823
  %v825 = vmul.f32 %v409, %v824
  %v826 = vmul.f32 %v410, %v824
  %v827 = vmul.f32 %v411, %v824
  %v828 = vmul.f32 %v412, %v824
  %v829 = vmul.f32 %v413, %v824
  %v830 = vmul.f32 %v417, %v824
  %v831 = vmul.f32 %v418, %v824
  %v832 = vmul.f32 %v419, %v824
  %v833 = vmul.f32 %v420, %v824
  %v834 = vmul.f32 %v421, %v824
  %v845 = vrot.slane %v825, 1
  %v846 = vrot.slane %v826, 1
  %v847 = vrot.slane %v827, 1
  %v848 = vrot.slane %v828, 1
  %v849 = vrot.slane %v829, 1
  %v850 = vrot.slane %v830, 1
  %v851 = vrot.slane %v831, 1
  %v852 = vrot.slane %v832, 1
  %v853 = vrot.slane %v833, 1
  %v854 = vrot.slane %v834, 1
  %v865 = vadd.f32 %v811, %v845
  %v866 = vadd.f32 %v812, %v846
  %v867 = vadd.f32 %v813, %v847
  %v868 = vadd.f32 %v814, %v848
  %v869 = vadd.f32 %v815, %v849
  %v870 = vadd.f32 %v816, %v850
  %v871 = vadd.f32 %v817, %v851
  %v872 = vadd.f32 %v818, %v852
  %v873 = vadd.f32 %v819, %v853
  %v874 = vadd.f32 %v820, %v854
  %v875 = vlaneseq
  %v876 = vshrl.u32 %v875, 7
  %v877 = vsub.s32 2, %v876
  %v878 = vrot.slane %v424, %v877
  %v879 = vmul.f32 %v409, %v878
  %v880 = vmul.f32 %v410, %v878
  %v881 = vmul.f32 %v411, %v878
  %v882 = vmul.f32 %v412, %v878
  %v883 = vmul.f32 %v413, %v878
  %v884 = vmul.f32 %v417, %v878
  %v885 = vmul.f32 %v418, %v878
  %v886 = vmul.f32 %v419, %v878
  %v887 = vmul.f32 %v420, %v878
  %v888 = vmul.f32 %v421, %v878
  %v899 = vrot.slane %v879, 2
  %v900 = vrot.slane %v880, 2
  %v901 = vrot.slane %v881, 2
  %v902 = vrot.slane %v882, 2
  %v903 = vrot.slane %v883, 2
  %v904 = vrot.slane %v884, 2
  %v905 = vrot.slane %v885, 2
  %v906 = vrot.slane %v886, 2
  %v907 = vrot.slane %v887, 2
  %v908 = vrot.slane %v888, 2
  %v919 = vadd.f32 %v865, %v899
  %v920 = vadd.f32 %v866, %v900
  %v921 = vadd.f32 %v867, %v901
  %v922 = vadd.f32 %v868, %v902
  %v923 = vadd.f32 %v869, %v903
  %v924 = vadd.f32 %v870, %v904
  %v925 = vadd.f32 %v871, %v905
  %v926 = vadd.f32 %v872, %v906
  %v927 = vadd.f32 %v873, %v907
  %v928 = vadd.f32 %v874, %v908
  %v929 = vlaneseq
  %v930 = vshrl.u32 %v929, 7
  %v931 = vsub.s32 3, %v930
  %v932 = vrot.slane %v424, %v931
  %v933 = vmul.f32 %v409, %v932
  %v934 = vmul.f32 %v410, %v932
  %v935 = vmul.f32 %v411, %v932
  %v936 = vmul.f32 %v412, %v932
  %v937 = vmul.f32 %v413, %v932
  %v938 = vmul.f32 %v417, %v932
  %v939 = vmul.f32 %v418, %v932
  %v940 = vmul.f32 %v419, %v932
  %v941 = vmul.f32 %v420, %v932
  %v942 = vmul.f32 %v421, %v932
  %v953 = vrot.slane %v933, 3
  %v954 = vrot.slane %v934, 3
  %v955 = vrot.slane %v935, 3
  %v956 = vrot.slane %v936, 3
  %v957 = vrot.slane %v937, 3
  %v958 = vrot.slane %v938, 3
  %v959 = vrot.slane %v939, 3
  %v960 = vrot.slane %v940, 3
  %v961 = vrot.slane %v941, 3
  %v962 = vrot.slane %v942, 3
  %v973 = vadd.f32 %v919, %v953
  %v974 = vadd.f32 %v920, %v954
  %v975 = vadd.f32 %v921, %v955
  %v976 = vadd.f32 %v922, %v956
  %v977 = vadd.f32 %v923, %v957
  %v978 = vadd.f32 %v924, %v958
  %v979 = vadd.f32 %v925, %v959
  %v980 = vadd.f32 %v926, %v960
  %v981 = vadd.f32 %v927, %v961
  %v982 = vadd.f32 %v928, %v962
  %v983 = vlaneseq
  %v984 = vshrl.u32 %v983, 7
  %v985 = vsub.s32 4, %v984
  %v986 = vrot.slane %v424, %v985
  %v987 = vmul.f32 %v410, %v986
  %v988 = vmul.f32 %v411, %v986
  %v989 = vmul.f32 %v412, %v986
  %v990 = vmul.f32 %v413, %v986
  %v991 = vmul.f32 %v414, %v986
  %v992 = vmul.f32 %v418, %v986
  %v993 = vmul.f32 %v419, %v986
  %v994 = vmul.f32 %v420, %v986
  %v995 = vmul.f32 %v421, %v986
  %v996 = vmul.f32 %v422, %v986
  %v997 = vadd.f32 %v973, %v987
  %v998 = vadd.f32 %v974, %v988
  %v999 = vadd.f32 %v975, %v989
  %v1000 = vadd.f32 %v976, %v990
  %v1001 = vadd.f32 %v977, %v991
  %v1002 = vadd.f32 %v978, %v992
  %v1003 = vadd.f32 %v979, %v993
  %v1004 = vadd.f32 %v980, %v994
  %v1005 = vadd.f32 %v981, %v995
  %v1006 = vadd.f32 %v982, %v996
  %v1007 = vlaneseq
  %v1008 = vshrl.u32 %v1007, 7
  %v1009 = vsub.s32 5, %v1008
  %v1010 = vrot.slane %v424, %v1009
  %v1011 = vmul.f32 %v410, %v1010
  %v1012 = vmul.f32 %v411, %v1010
  %v1013 = vmul.f32 %v412, %v1010
  %v1014 = vmul.f32 %v413, %v1010
  %v1015 = vmul.f32 %v414, %v1010
  %v1016 = vmul.f32 %v418, %v1010
  %v1017 = vmul.f32 %v419, %v1010
  %v1018 = vmul.f32 %v420, %v1010
  %v1019 = vmul.f32 %v421, %v1010
  %v1020 = vmul.f32 %v422, %v1010
  %v1031 = vrot.slane %v1011, 1
  %v1032 = vrot.slane %v1012, 1
  %v1033 = vrot.slane %v1013, 1
  %v1034 = vrot.slane %v1014, 1
  %v1035 = vrot.slane %v1015, 1
  %v1036 = vrot.slane %v1016, 1
  %v1037 = vrot.slane %v1017, 1
  %v1038 = vrot.slane %v1018, 1
  %v1039 = vrot.slane %v1019, 1
  %v1040 = vrot.slane %v1020, 1
  %v1051 = vadd.f32 %v997, %v1031
  %v1052 = vadd.f32 %v998, %v1032
  %v1053 = vadd.f32 %v999, %v1033
  %v1054 = vadd.f32 %v1000, %v1034
  %v1055 = vadd.f32 %v1001, %v1035
  %v1056 = vadd.f32 %v1002, %v1036
  %v1057 = vadd.f32 %v1003, %v1037
  %v1058 = vadd.f32 %v1004, %v1038
  %v1059 = vadd.f32 %v1005, %v1039
  %v1060 = vadd.f32 %v1006, %v1040
  %v1061 = vlaneseq
  %v1062 = vshrl.u32 %v1061, 7
  %v1063 = vsub.s32 6, %v1062
  %v1064 = vrot.slane %v424, %v1063
  %v1065 = vmul.f32 %v410, %v1064
  %v1066 = vmul.f32 %v411, %v1064
  %v1067 = vmul.f32 %v412, %v1064
  %v1068 = vmul.f32 %v413, %v1064
  %v1069 = vmul.f32 %v414, %v1064
  %v1070 = vmul.f32 %v418, %v1064
  %v1071 = vmul.f32 %v419, %v1064
  %v1072 = vmul.f32 %v420, %v1064
  %v1073 = vmul.f32 %v421, %v1064
  %v1074 = vmul.f32 %v422, %v1064
  %v1085 = vrot.slane %v1065, 2
  %v1086 = vrot.slane %v1066, 2
  %v1087 = vrot.slane %v1067, 2
  %v1088 = vrot.slane %v1068, 2
  %v1089 = vrot.slane %v1069, 2
  %v1090 = vrot.slane %v1070, 2
  %v1091 = vrot.slane %v1071, 2
  %v1092 = vrot.slane %v1072, 2
  %v1093 = vrot.slane %v1073, 2
  %v1094 = vrot.slane %v1074, 2
  %v1105 = vadd.f32 %v1051, %v1085
  %v1106 = vadd.f32 %v1052, %v1086
  %v1107 = vadd.f32 %v1053, %v1087
  %v1108 = vadd.f32 %v1054, %v1088
  %v1109 = vadd.f32 %v1055, %v1089
  %v1110 = vadd.f32 %v1056, %v1090
  %v1111 = vadd.f32 %v1057, %v1091
  %v1112 = vadd.f32 %v1058, %v1092
  %v1113 = vadd.f32 %v1059, %v1093
  %v1114 = vadd.f32 %v1060, %v1094
  %v1115 = vlaneseq
  %v1116 = vshrl.u32 %v1115, 7
  %v1117 = vsub.s32 7, %v1116
  %v1118 = vrot.slane %v424, %v1117
  %v1119 = vmul.f32 %v410, %v1118
  %v1120 = vmul.f32 %v411, %v1118
  %v1121 = vmul.f32 %v412, %v1118
  %v1122 = vmul.f32 %v413, %v1118
  %v1123 = vmul.f32 %v414, %v1118
  %v1124 = vmul.f32 %v418, %v1118
  %v1125 = vmul.f32 %v419, %v1118
  %v1126 = vmul.f32 %v420, %v1118
  %v1127 = vmul.f32 %v421, %v1118
  %v1128 = vmul.f32 %v422, %v1118
  %v1139 = vrot.slane %v1119, 3
  %v1140 = vrot.slane %v1120, 3
  %v1141 = vrot.slane %v1121, 3
  %v1142 = vrot.slane %v1122, 3
  %v1143 = vrot.slane %v1123, 3
  %v1144 = vrot.slane %v1124, 3
  %v1145 = vrot.slane %v1125, 3
  %v1146 = vrot.slane %v1126, 3
  %v1147 = vrot.slane %v1127, 3
  %v1148 = vrot.slane %v1128, 3
  %v1159 = vadd.f32 %v1105, %v1139
  %v1160 = vadd.f32 %v1106, %v1140
  %v1161 = vadd.f32 %v1107, %v1141
  %v1162 = vadd.f32 %v1108, %v1142
  %v1163 = vadd.f32 %v1109, %v1143
  %v1164 = vadd.f32 %v1110, %v1144
  %v1165 = vadd.f32 %v1111, %v1145
  %v1166 = vadd.f32 %v1112, %v1146
  %v1167 = vadd.f32 %v1113, %v1147
  %v1168 = vadd.f32 %v1114, %v1148
  %vm1169 = vcmask 258048
  %v1170 = vsel %vm1169, %v1159, 0.0
  %1171 = vadd.xlane.f32.xlu0 %v1170
  %v1172 = vpop.xlane.xlu0 %1171
  %v1173 = vsel %vm1169, %v1160, 0.0
  %1174 = vadd.xlane.f32.xlu0 %v1173
  %v1175 = vpop.xlane.xlu0 %1174
  %v1176 = vsel %vm1169, %v1161, 0.0
  %1177 = vadd.xlane.f32.xlu0 %v1176
  %v1178 = vpop.xlane.xlu0 %1177
  %v1179 = vsel %vm1169, %v1162, 0.0
  %1180 = vadd.xlane.f32.xlu0 %v1179
  %v1181 = vpop.xlane.xlu0 %1180
  %v1182 = vsel %vm1169, %v1163, 0.0
  %1183 = vadd.xlane.f32.xlu0 %v1182
  %v1184 = vpop.xlane.xlu0 %1183
  %v1185 = vsel %vm1169, %v1164, 0.0
  %1186 = vadd.xlane.f32.xlu0 %v1185
  %v1187 = vpop.xlane.xlu0 %1186
  %v1188 = vsel %vm1169, %v1165, 0.0
  %1189 = vadd.xlane.f32.xlu0 %v1188
  %v1190 = vpop.xlane.xlu0 %1189
  %v1191 = vsel %vm1169, %v1166, 0.0
  %1192 = vadd.xlane.f32.xlu0 %v1191
  %v1193 = vpop.xlane.xlu0 %1192
  %v1194 = vsel %vm1169, %v1167, 0.0
  %1195 = vadd.xlane.f32.xlu0 %v1194
  %v1196 = vpop.xlane.xlu0 %1195
  %v1197 = vsel %vm1169, %v1168, 0.0
  %1198 = vadd.xlane.f32.xlu0 %v1197
  %v1199 = vpop.xlane.xlu0 %1198
  %v1210 = vlaneseq
  %v1211 = vand.u32 %v1210, 127
  %v1212 = vlaneseq
  %v1213 = vshrl.u32 %v1212, 7
  %v1214 = vsub.s32 %v1211, %v1213
  %v1215 = vrot.slane %v1172, %v1214
  %v1216 = vlaneseq
  %v1217 = vshrl.u32 %v1216, 7
  %v1218 = vsub.s32 %v1211, %v1217
  %v1219 = vrot.slane %v1175, %v1218
  %v1220 = vlaneseq
  %v1221 = vshrl.u32 %v1220, 7
  %v1222 = vsub.s32 %v1211, %v1221
  %v1223 = vrot.slane %v1178, %v1222
  %v1224 = vlaneseq
  %v1225 = vshrl.u32 %v1224, 7
  %v1226 = vsub.s32 %v1211, %v1225
  %v1227 = vrot.slane %v1181, %v1226
  %v1228 = vlaneseq
  %v1229 = vshrl.u32 %v1228, 7
  %v1230 = vsub.s32 %v1211, %v1229
  %v1231 = vrot.slane %v1184, %v1230
  %v1232 = vlaneseq
  %v1233 = vshrl.u32 %v1232, 7
  %v1234 = vsub.s32 %v1211, %v1233
  %v1235 = vrot.slane %v1187, %v1234
  %v1236 = vlaneseq
  %v1237 = vshrl.u32 %v1236, 7
  %v1238 = vsub.s32 %v1211, %v1237
  %v1239 = vrot.slane %v1190, %v1238
  %v1240 = vlaneseq
  %v1241 = vshrl.u32 %v1240, 7
  %v1242 = vsub.s32 %v1211, %v1241
  %v1243 = vrot.slane %v1193, %v1242
  %v1244 = vlaneseq
  %v1245 = vshrl.u32 %v1244, 7
  %v1246 = vsub.s32 %v1211, %v1245
  %v1247 = vrot.slane %v1196, %v1246
  %v1248 = vlaneseq
  %v1249 = vshrl.u32 %v1248, 7
  %v1250 = vsub.s32 %v1211, %v1249
  %v1251 = vrot.slane %v1199, %v1250
  %vm1252 = vcmask 1041409
  %v1253 = vsel %vm1252, %v1219, %v1215
  %vm1254 = vcmask 1042434
  %v1255 = vsel %vm1254, %v1223, %v1253
  %vm1256 = vcmask 1043459
  %v1257 = vsel %vm1256, %v1227, %v1255
  %vm1258 = vcmask 1044484
  %v1259 = vsel %vm1258, %v1231, %v1257
  %v1260 = vsel %vm1252, %v1239, %v1235
  %v1261 = vsel %vm1254, %v1243, %v1260
  %v1262 = vsel %vm1256, %v1247, %v1261
  %v1263 = vsel %vm1258, %v1251, %v1262
  %vm1266 = vcmask 36864
  %1267 = vst.msk [vmem:[%s4] sm:$0x1f] %vm1266, %v1259
  %1268 = vst.msk [vmem:[%s4 + $0x8] sm:$0x1f] %vm1266, %v1263
  // Predicated region
  $region18: #{single_disc_forward.1} parent=0 // pred_check
    _
  $region19: #{single_disc_forward.1} parent=0 // pred_check_branch
    %1270 = sbr.rel (0) target = $region21
  $region20: #{single_disc_forward.1} parent=0 // pred_region
    _
  $region21: #{single_disc_forward.1} parent=0 // pred_fallthru
    _
  // Predicated region
  $region22: #{single_disc_forward.1} parent=0 // pred_check
    _
  $region23: #{single_disc_forward.1} parent=0 // pred_check_branch
    %1272 = sbr.rel (0) target = $region25
  $region24: #{single_disc_forward.1} parent=0 // pred_region
    _
  $region25: #{single_disc_forward.1} parent=0 // pred_fallthru
    _

</llo_original>
